<compile_context>
chip_gen: v6e
topology: v6e:2x2x1
jax: 0.10.0
libtpu: 0.0.40
codegen_flags: <defaults>
</compile_context>

<pallas_src>
import functools

import jax
import jax.numpy as jnp
from jax import lax
from jax.experimental import pallas as pl
from jax.experimental.pallas import tpu as pltpu


def _round_up(n, m):
    return ((n + m - 1) // m) * m


def _pad_to(a, shape):
    pads = [(0, t - s) for s, t in zip(a.shape, shape)]
    if all(p == (0, 0) for p in pads):
        return a
    return jnp.pad(a, pads)


def _tpu_generation_info():
    """Best-effort (generation tag, physical per-core VMEM bytes)."""
    kind = ""
    try:
        kind = jax.devices()[0].device_kind.lower()
    except Exception:
        pass
    if "v7" in kind:
        gen = "v7x"
    elif "v6" in kind:
        gen = "v6e"
    elif "v5" in kind:
        gen = "v5e"
    else:
        gen = "other"
    try:
        vmem_cap = int(pltpu.get_tpu_info().vmem_capacity_bytes)
    except Exception:
        vmem_cap = (64 if gen == "v7x" else 128) * 1024 * 1024
    return gen, vmem_cap


# --------------------------- grouped expert kernel --------------------------
def _moe_group_ffn_kernel(te_ref, x_ref, cw_ref, w1_ref, b1_ref, w3_ref,
                          b3_ref, w2_ref, b2_ref, o_ref):
    """Grid: (token tile i, hidden tile h).

    Every token tile belongs to exactly one expert; the expert id lives in the
    scalar-prefetched `te_ref` and is resolved inside the BlockSpec index_maps
    (so this body never sees it).  The FFN output for the tile, pre-scaled by
    the per-row combine weight, is accumulated H-tile by H-tile into the
    resident f32 output block (h is the reduction axis, last in the grid).
    """
    del te_ref                                   # used only by the index_maps
    h = pl.program_id(1)
    cw = cw_ref[...]                             # (tm, 1) f32 combine weights

    @pl.when(h == 0)
    def _init():
        # w2 bias added exactly once per routed row, already combine-scaled.
        o_ref[...] = cw * b2_ref[0]

    x = x_ref[...]                               # (tm, Dp) compute dtype
    h1 = jnp.dot(x, w1_ref[0], preferred_element_type=jnp.float32) + b1_ref[0]
    h3 = jnp.dot(x, w3_ref[0], preferred_element_type=jnp.float32) + b3_ref[0]
    g = jax.nn.silu(h1) * h3                     # (tm, th) f32
    # Fold the combine weight into g before the second matmul (tm*th mults
    # instead of tm*Dp) -- distributes exactly over the matmul.
    g = (g * cw).astype(x.dtype)
    o_ref[...] += jnp.dot(g, w2_ref[0], preferred_element_type=jnp.float32)


def moe_experts_grouped(tile_expert, xg, cw, w1, b1, w3, b3, w2, b2, *,
                        tm, th, vmem_limit=None, cost_estimate=None):
    """xg: (Np, Dp) routed+padded rows; cw: (Np, 1) f32 combine weights;
    tile_expert: (Np // tm,) int32 expert id per token tile (scalar prefetch);
    w1/w3: (E, Dp, Hp); w2: (E, Hp, Dp); biases (E, 1, *) f32.
    Returns (Np, Dp) f32 per-row scaled expert outputs."""
    Np, Dp = xg.shape
    E, _, Hp = w1.shape
    num_tiles = Np // tm
    grid = (num_tiles, Hp // th)

    cp_kwargs = dict(dimension_semantics=("parallel", "arbitrary"))
    if vmem_limit is not None:
        cp_kwargs["vmem_limit_bytes"] = int(vmem_limit)

    # TODO(synk): add pipeline_mode=pl.Buffered(3) on the weight specs for
    # decode-sized (weight-DMA-bound) problems on v5e/v6e, and a second
    # "parallel" output-dim grid axis so both v7x TensorCores get work when
    # num_tiles < 2.
    return pl.pallas_call(
        _moe_group_ffn_kernel,
        out_shape=jax.ShapeDtypeStruct((Np, Dp), jnp.float32),
        grid_spec=pltpu.PrefetchScalarGridSpec(
            num_scalar_prefetch=1,
            grid=grid,
            in_specs=[
                pl.BlockSpec((tm, Dp), lambda i, h, te: (i, 0)),            # x
                pl.BlockSpec((tm, 1), lambda i, h, te: (i, 0)),             # cw
                pl.BlockSpec((1, Dp, th), lambda i, h, te: (te[i], 0, h)),  # w1
                pl.BlockSpec((1, 1, th), lambda i, h, te: (te[i], 0, h)),   # b1
                pl.BlockSpec((1, Dp, th), lambda i, h, te: (te[i], 0, h)),  # w3
                pl.BlockSpec((1, 1, th), lambda i, h, te: (te[i], 0, h)),   # b3
                pl.BlockSpec((1, th, Dp), lambda i, h, te: (te[i], h, 0)),  # w2
                pl.BlockSpec((1, 1, Dp), lambda i, h, te: (te[i], 0, 0)),   # b2
            ],
            out_specs=pl.BlockSpec((tm, Dp), lambda i, h, te: (i, 0)),
        ),
        compiler_params=pltpu.CompilerParams(**cp_kwargs),
        cost_estimate=cost_estimate,
    )(tile_expert, xg, cw, w1, b1, w3, b3, w2, b2)


# ------------------------------ full forward --------------------------------
def moe_forward(x, params, *, num_experts_per_tok, tm=None, th=None,
                compute_dtype=jnp.bfloat16):
    """x: (B, S, D) -> (B, S, D).  Matches MoE.forward (eval, mp world = 1)."""
    orig_shape = x.shape
    orig_dtype = x.dtype
    D = x.shape[-1]
    xf = x.reshape(-1, D)
    T = xf.shape[0]
    E = params["gate_w"].shape[1]
    H = params["w1s"].shape[2]
    k = num_experts_per_tok
    N = T * k                                    # total routed (token, expert) rows

    # ---- gate: tiny matmul + softmax + top-k, plain JAX in f32 -------------
    logits = jnp.dot(xf.astype(jnp.float32),
                     params["gate_w"].astype(jnp.float32))
    scores = jax.nn.softmax(logits, axis=-1)
    top_w, top_idx = lax.top_k(scores, k)                     # (T, k)
    top_w = top_w / jnp.sum(top_w, axis=-1, keepdims=True)

    # ---- generation-aware tile selection ------------------------------------
    gen, vmem_cap = _tpu_generation_info()
    if tm is None:
        tm = 512 if gen == "v6e" else 256        # v6e: compute-bound crossover
    tm = max(8, min(_round_up(tm, 8), _round_up(N, 8)))       # shrink for tiny N
    gran = 256 if gen in ("v6e", "v7x") else 128              # MXU width
    if th is None:
        th = 512
    th = max(gran, _round_up(th, gran))
    th = min(th, _round_up(H, gran))

    Dp = _round_up(D, 128)
    itm = jnp.dtype(compute_dtype).itemsize

    def _vmem_est(tm_, th_):
        # conservative double-buffered block footprint (lane/sublane padded)
        return 2 * (tm_ * Dp * itm               # x tile
                    + tm_ * 128 * 4              # cw tile (lane padded)
                    + 2 * Dp * th_ * itm         # w1, w3 tiles
                    + th_ * Dp * itm             # w2 tile
                    + 2 * 8 * th_ * 4            # b1, b3
                    + 8 * Dp * 4                 # b2
                    + tm_ * Dp * 4)              # f32 output tile

    if gen == "v7x":
        budget = min(int(vmem_cap * 0.80), 52 * 1024 * 1024)  # never the 64 MiB cap
    else:
        budget = min(int(vmem_cap * 0.75), 96 * 1024 * 1024)
    while _vmem_est(tm, th) > budget and th > gran:
        th -= gran                               # shrink hidden tile first (roofline-free)
    while _vmem_est(tm, th) > budget and tm > 8:
        tm = max(8, _round_up(tm // 2, 8))       # last resort
    Hp = _round_up(H, th)                        # zero padding of H is exact

    # ---- grouped dispatch: sort routed rows by expert, pad groups to tm ----
    flat_expert = top_idx.reshape(-1).astype(jnp.int32)               # (N,)
    flat_w = top_w.reshape(-1)
    flat_token = (jnp.arange(N, dtype=jnp.int32) // k)                # repeat_interleave order
    order = jnp.argsort(flat_expert)
    sorted_expert = flat_expert[order]
    sorted_token = flat_token[order]
    sorted_w = flat_w[order]

    g_sizes = jnp.bincount(flat_expert, length=E).astype(jnp.int32)   # (E,)
    g_start = jnp.concatenate([jnp.zeros((1,), jnp.int32),
                               jnp.cumsum(g_sizes)[:-1]]).astype(jnp.int32)
    pg_sizes = ((g_sizes + tm - 1) // tm) * tm                        # tm-aligned groups
    pg_start = jnp.concatenate([jnp.zeros((1,), jnp.int32),
                                jnp.cumsum(pg_sizes)[:-1]]).astype(jnp.int32)
    pg_end = jnp.cumsum(pg_sizes).astype(jnp.int32)

    within = jnp.arange(N, dtype=jnp.int32) - g_start[sorted_expert]
    dest = pg_start[sorted_expert] + within                           # padded-row slot

    num_tiles = pl.cdiv(N, tm) + E - 1           # static upper bound on Σ⌈g_e/tm⌉
    Np = num_tiles * tm

    tile_start = jnp.arange(num_tiles, dtype=jnp.int32) * tm
    tile_expert = jnp.searchsorted(pg_end, tile_start, side="right")
    tile_expert = jnp.minimum(tile_expert, E - 1).astype(jnp.int32)   # pad tiles -> expert 0..E-1

    # Gather routed activations (padding rows read an all-zero row; their
    # combine weight is 0 so they contribute nothing and are never read back).
    x_pad = _pad_to(xf, (T, Dp)).astype(compute_dtype)
    x_ext = jnp.concatenate([x_pad, jnp.zeros((1, Dp), compute_dtype)], axis=0)
    gather_idx = jnp.full((Np,), T, jnp.int32).at[dest].set(sorted_token)
    xg = jnp.take(x_ext, gather_idx, axis=0)                          # (Np, Dp)
    cw_g = jnp.zeros((Np, 1), jnp.float32).at[dest, 0].set(sorted_w)
    inv_pos = jnp.zeros((N,), jnp.int32).at[order].set(dest)          # combine = gather

    # ---- padded / cast weights ----------------------------------------------
    w1 = _pad_to(params["w1s"], (E, Dp, Hp)).astype(compute_dtype)
    w3 = _pad_to(params["w3s"], (E, Dp, Hp)).astype(compute_dtype)
    w2 = _pad_to(params["w2s"], (E, Hp, Dp)).astype(compute_dtype)
    b1 = _pad_to(params["b1s"], (E, 1, Hp)).astype(jnp.float32)
    b3 = _pad_to(params["b3s"], (E, 1, Hp)).astype(jnp.float32)
    b2 = _pad_to(params["b2s"], (E, 1, Dp)).astype(jnp.float32)

    # ---- VMEM limit (only when the default scoped limit is too small) ------
    est = _vmem_est(tm, th)
    default_scoped = (16 if gen == "v5e" else 32) * 1024 * 1024
    vmem_limit = None
    if est > int(default_scoped * 0.9):
        vmem_limit = int(min(est * 1.4 + (1 << 20), budget))

    ce = pl.CostEstimate(
        flops=int(6 * Np * Dp * Hp),
        transcendentals=int(Np * Hp),
        bytes_accessed=int(num_tiles * 3 * Dp * Hp * itm
                           + Np * Dp * (itm + 4) + Np * 4),
    )

    y_pad = moe_experts_grouped(tile_expert, xg, cw_g, w1, b1, w3, b3, w2, b2,
                                tm=tm, th=th, vmem_limit=vmem_limit,
                                cost_estimate=ce)                     # (Np, Dp) f32

    # ---- combine: unsort (gather) + sum over the k routed copies ------------
    y_flat = jnp.take(y_pad, inv_pos, axis=0)                         # (N, Dp)
    y = jnp.sum(y_flat.reshape(T, k, Dp), axis=1)[:, :D]
    return y.astype(orig_dtype).reshape(orig_shape)


# -------------------------- pure-JAX reference -------------------------------
def moe_reference(x, params, *, num_experts_per_tok):
    D = x.shape[-1]
    xf = x.reshape(-1, D).astype(jnp.float32)
    logits = xf @ params["gate_w"].astype(jnp.float32)
    scores = jax.nn.softmax(logits, axis=-1)
    top_w, top_idx = lax.top_k(scores, num_experts_per_tok)
    top_w = top_w / jnp.sum(top_w, axis=-1, keepdims=True)
    E = params["gate_w"].shape[1]
    cw = jnp.zeros((xf.shape[0], E), jnp.float32).at[
        jnp.arange(xf.shape[0])[:, None], top_idx].set(top_w)

    def expert(e, xi):
        h1 = xi @ params["w1s"][e] + params["b1s"][e, 0]
        h3 = xi @ params["w3s"][e] + params["b3s"][e, 0]
        return (jax.nn.silu(h1) * h3) @ params["w2s"][e] + params["b2s"][e, 0]

    y = jnp.zeros_like(xf)
    for e in range(E):
        y = y + cw[:, e:e + 1] * expert(e, xf)
    return y.reshape(x.shape)


# --------------------------------- main --------------------------------------
if __name__ == "__main__":
    B, S = 2, 8
    dim, hidden_dim = 32, 64
    num_experts, num_experts_per_tok = 8, 2
    lora_rank = 4

    key = jax.random.PRNGKey(0)
    ks = jax.random.split(key, 16)

    def lora_linear_weight(kk, d_in, d_out, scale):
        # base weight + folded LoRA low-rank update (W_eff = W + A @ B)
        k0, k1, k2 = jax.random.split(kk, 3)
        w = jax.random.normal(k0, (d_in, d_out), jnp.float32) * scale
        a = jax.random.normal(k1, (d_in, lora_rank), jnp.float32) * scale
        b = jax.random.normal(k2, (lora_rank, d_out), jnp.float32) * scale
        return w + a @ b

    def stack(fn, kk, n):
        return jnp.stack([fn(sub) for sub in jax.random.split(kk, n)])

    params = {
        "gate_w": jax.random.normal(ks[0], (dim, num_experts), jnp.float32) * 0.1,
        "w1s": stack(lambda kk: lora_linear_weight(kk, dim, hidden_dim, 0.05),
                     ks[1], num_experts),
        "b1s": stack(lambda kk: jax.random.normal(kk, (1, hidden_dim)) * 0.01,
                     ks[2], num_experts),
        "w3s": stack(lambda kk: lora_linear_weight(kk, dim, hidden_dim, 0.05),
                     ks[3], num_experts),
        "b3s": stack(lambda kk: jax.random.normal(kk, (1, hidden_dim)) * 0.01,
                     ks[4], num_experts),
        "w2s": stack(lambda kk: lora_linear_weight(kk, hidden_dim, dim, 0.05),
                     ks[5], num_experts),
        "b2s": stack(lambda kk: jax.random.normal(kk, (1, dim)) * 0.01,
                     ks[6], num_experts),
    }

    x = jax.random.normal(ks[7], (B, S, dim), jnp.float32)
    ref = moe_reference(x, params, num_experts_per_tok=num_experts_per_tok)

    # 1) f32 compute path: tight check against the reference.
    fwd_f32 = jax.jit(functools.partial(
        moe_forward, num_experts_per_tok=num_experts_per_tok,
        compute_dtype=jnp.float32))
    out_f32 = fwd_f32(x, params)
    jax.block_until_ready(out_f32)
    assert out_f32.shape == x.shape
    assert jnp.allclose(out_f32, ref, atol=1e-3, rtol=1e-3), (
        float(jnp.max(jnp.abs(out_f32 - ref))))

    # 2) bf16 MXU operands + f32 accumulation (default performance path).
    fwd_bf16 = jax.jit(functools.partial(
        moe_forward, num_experts_per_tok=num_experts_per_tok,
        compute_dtype=jnp.bfloat16))
    out_bf16 = fwd_bf16(x, params)
    jax.block_until_ready(out_bf16)
    assert jnp.allclose(out_bf16, ref, atol=2e-2, rtol=5e-2), (
        float(jnp.max(jnp.abs(out_bf16 - ref))))

    # 3) bf16 activations end-to-end.
    xb = x.astype(jnp.bfloat16)
    out_b = jax.jit(functools.partial(
        moe_forward, num_experts_per_tok=num_experts_per_tok))(xb, params)
    jax.block_until_ready(out_b)
    ref_b = moe_reference(xb.astype(jnp.float32), params,
                          num_experts_per_tok=num_experts_per_tok)
    assert out_b.dtype == jnp.bfloat16
    assert jnp.allclose(out_b.astype(jnp.float32), ref_b, atol=2e-2, rtol=5e-2), (
        float(jnp.max(jnp.abs(out_b.astype(jnp.float32) - ref_b))))

    print("KERNEL_OK")
</pallas_src>

<mosaic_0001>
module attributes {stable_mosaic.version = 11 : i64} {
  func.func private @main(%arg0: i32) attributes {dimension_semantics = [#tpu.dimension_semantics<core_parallel>], iteration_bounds = array<i64: 2>, tpu.core_type = #tpu.core_type<sc_scalar_subcore>, window_params = []} {
    return
  }
}

module attributes {stable_mosaic.version = 11 : i64} {
  func.func private @main(%arg0: i32) attributes {dimension_semantics = [#tpu.dimension_semantics<core_parallel>], iteration_bounds = array<i64: 2>, tpu.core_type = #tpu.core_type<sc_scalar_subcore>, window_params = []} {
    return
  }
}

module attributes {stable_mosaic.version = 11 : i64} {
  func.func @_moe_group_ffn_kernel(%arg0: i32, %arg1: i32, %arg2: memref<8xi32, #tpu.memory_space<smem>>, %arg3: memref<32x128xf32, #tpu.memory_space<vmem>>, %arg4: memref<32x1xf32, #tpu.memory_space<vmem>>, %arg5: memref<1x128x128xf32, #tpu.memory_space<vmem>>, %arg6: memref<1x1x128xf32, #tpu.memory_space<vmem>>, %arg7: memref<1x128x128xf32, #tpu.memory_space<vmem>>, %arg8: memref<1x1x128xf32, #tpu.memory_space<vmem>>, %arg9: memref<1x128x128xf32, #tpu.memory_space<vmem>>, %arg10: memref<1x1x128xf32, #tpu.memory_space<vmem>>, %arg11: memref<32x128xf32, #tpu.memory_space<vmem>>) attributes {dimension_semantics = [#tpu.dimension_semantics<parallel>, #tpu.dimension_semantics<arbitrary>], iteration_bounds = array<i64: 8, 1>, scalar_prefetch = 1 : i64, scratch_operands = 0 : i64, tpu.core_type = #tpu.core_type<tc>, window_params = [{transform_indices = @transform_0, window_bounds = array<i64: 32, 128>}, {transform_indices = @transform_1, window_bounds = array<i64: 32, 1>}, {transform_indices = @transform_2, window_bounds = array<i64: 1, 128, 128>}, {transform_indices = @transform_3, window_bounds = array<i64: 1, 1, 128>}, {transform_indices = @transform_4, window_bounds = array<i64: 1, 128, 128>}, {transform_indices = @transform_5, window_bounds = array<i64: 1, 1, 128>}, {transform_indices = @transform_6, window_bounds = array<i64: 1, 128, 128>}, {transform_indices = @transform_7, window_bounds = array<i64: 1, 1, 128>}, {transform_indices = @transform_8, window_bounds = array<i64: 32, 128>}]} {
    %c0 = arith.constant 0 : index
    %c0_0 = arith.constant 0 : index
    %0 = vector.load %arg4[%c0, %c0_0] : memref<32x1xf32, #tpu.memory_space<vmem>>, vector<32x1xf32>
    %c0_i32 = arith.constant 0 : i32
    %1 = arith.cmpi eq, %arg1, %c0_i32 : i32
    %2 = arith.extui %1 : i1 to i32
    %c0_i32_1 = arith.constant 0 : i32
    %3 = arith.cmpi ne, %2, %c0_i32_1 : i32
    scf.if %3 {
      %c0_26 = arith.constant 0 : index
      %c0_27 = arith.constant 0 : index
      %c0_28 = arith.constant 0 : index
      %34 = vector.load %arg10[%c0_26, %c0_27, %c0_28] : memref<1x1x128xf32, #tpu.memory_space<vmem>>, vector<1x1x128xf32>
      %35 = vector.shape_cast %34 : vector<1x1x128xf32> to vector<1x128xf32>
      %36 = vector.broadcast %0 : vector<32x1xf32> to vector<32x128xf32>
      %37 = vector.broadcast %35 : vector<1x128xf32> to vector<32x128xf32>
      %38 = arith.mulf %36, %37 : vector<32x128xf32>
      %c0_29 = arith.constant 0 : index
      %c0_30 = arith.constant 0 : index
      %39 = vector.load %arg11[%c0_29, %c0_30] : memref<32x128xf32, #tpu.memory_space<vmem>>, vector<32x128xf32>
      tpu.vector_store %arg11[%c0_29, %c0_30], %38 {strides = array<i32>} : memref<32x128xf32, #tpu.memory_space<vmem>>, vector<32x128xf32>,
    } else {
    }
    %c0_2 = arith.constant 0 : index
    %c0_3 = arith.constant 0 : index
    %4 = vector.load %arg3[%c0_2, %c0_3] : memref<32x128xf32, #tpu.memory_space<vmem>>, vector<32x128xf32>
    %c0_4 = arith.constant 0 : index
    %c0_5 = arith.constant 0 : index
    %c0_6 = arith.constant 0 : index
    %5 = vector.load %arg5[%c0_4, %c0_5, %c0_6] : memref<1x128x128xf32, #tpu.memory_space<vmem>>, vector<1x128x128xf32>
    %6 = vector.shape_cast %5 : vector<1x128x128xf32> to vector<128x128xf32>
    %cst = arith.constant dense<0.000000e+00> : vector<32x128xf32>
    %7 = tpu.matmul %4, %6, %cst {dimension_numbers = #tpu.dot_dimension_numbers<[1], [0], [0], [1], [0, 0, 1, 1], [], []>} : vector<32x128xf32>, vector<128x128xf32>, vector<32x128xf32> -> vector<32x128xf32>
    %c0_7 = arith.constant 0 : index
    %c0_8 = arith.constant 0 : index
    %c0_9 = arith.constant 0 : index
    %8 = vector.load %arg6[%c0_7, %c0_8, %c0_9] : memref<1x1x128xf32, #tpu.memory_space<vmem>>, vector<1x1x128xf32>
    %9 = vector.shape_cast %8 : vector<1x1x128xf32> to vector<1x128xf32>
    %10 = vector.broadcast %9 : vector<1x128xf32> to vector<32x128xf32>
    %11 = arith.addf %7, %10 : vector<32x128xf32>
    %c0_10 = arith.constant 0 : index
    %c0_11 = arith.constant 0 : index
    %c0_12 = arith.constant 0 : index
    %12 = vector.load %arg7[%c0_10, %c0_11, %c0_12] : memref<1x128x128xf32, #tpu.memory_space<vmem>>, vector<1x128x128xf32>
    %13 = vector.shape_cast %12 : vector<1x128x128xf32> to vector<128x128xf32>
    %cst_13 = arith.constant dense<0.000000e+00> : vector<32x128xf32>
    %14 = tpu.matmul %4, %13, %cst_13 {dimension_numbers = #tpu.dot_dimension_numbers<[1], [0], [0], [1], [0, 0, 1, 1], [], []>} : vector<32x128xf32>, vector<128x128xf32>, vector<32x128xf32> -> vector<32x128xf32>
    %c0_14 = arith.constant 0 : index
    %c0_15 = arith.constant 0 : index
    %c0_16 = arith.constant 0 : index
    %15 = vector.load %arg8[%c0_14, %c0_15, %c0_16] : memref<1x1x128xf32, #tpu.memory_space<vmem>>, vector<1x1x128xf32>
    %16 = vector.shape_cast %15 : vector<1x1x128xf32> to vector<1x128xf32>
    %17 = vector.broadcast %16 : vector<1x128xf32> to vector<32x128xf32>
    %18 = arith.addf %14, %17 : vector<32x128xf32>
    %19 = arith.negf %11 : vector<32x128xf32>
    %20 = math.exp %19 : vector<32x128xf32>
    %cst_17 = arith.constant 1.000000e+00 : f32
    %21 = vector.broadcast %cst_17 : f32 to vector<32x128xf32>
    %22 = arith.addf %21, %20 : vector<32x128xf32>
    %23 = arith.divf %21, %22 : vector<32x128xf32>
    %24 = arith.mulf %11, %23 : vector<32x128xf32>
    %25 = arith.mulf %24, %18 : vector<32x128xf32>
    %26 = vector.broadcast %0 : vector<32x1xf32> to vector<32x128xf32>
    %27 = arith.mulf %25, %26 : vector<32x128xf32>
    %c0_18 = arith.constant 0 : index
    %c0_19 = arith.constant 0 : index
    %28 = vector.load %arg11[%c0_18, %c0_19] : memref<32x128xf32, #tpu.memory_space<vmem>>, vector<32x128xf32>
    %c0_20 = arith.constant 0 : index
    %c0_21 = arith.constant 0 : index
    %c0_22 = arith.constant 0 : index
    %29 = vector.load %arg9[%c0_20, %c0_21, %c0_22] : memref<1x128x128xf32, #tpu.memory_space<vmem>>, vector<1x128x128xf32>
    %30 = vector.shape_cast %29 : vector<1x128x128xf32> to vector<128x128xf32>
    %cst_23 = arith.constant dense<0.000000e+00> : vector<32x128xf32>
    %31 = tpu.matmul %27, %30, %cst_23 {dimension_numbers = #tpu.dot_dimension_numbers<[1], [0], [0], [1], [0, 0, 1, 1], [], []>} : vector<32x128xf32>, vector<128x128xf32>, vector<32x128xf32> -> vector<32x128xf32>
    %32 = arith.addf %28, %31 : vector<32x128xf32>
    %c0_24 = arith.constant 0 : index
    %c0_25 = arith.constant 0 : index
    %33 = vector.load %arg11[%c0_24, %c0_25] : memref<32x128xf32, #tpu.memory_space<vmem>>, vector<32x128xf32>
    tpu.vector_store %arg11[%c0_24, %c0_25], %32 {strides = array<i32>} : memref<32x128xf32, #tpu.memory_space<vmem>>, vector<32x128xf32>,
    return
  }
  func.func @transform_0(%arg0: i32, %arg1: i32, %arg2: memref<8xi32, #tpu.memory_space<smem>>) -> (i32, i32) {
    %c0_i32 = arith.constant 0 : i32
    %c0_i32_0 = arith.constant 0 : i32
    return %arg0, %c0_i32 : i32, i32
  }
  func.func @transform_1(%arg0: i32, %arg1: i32, %arg2: memref<8xi32, #tpu.memory_space<smem>>) -> (i32, i32) {
    %c0_i32 = arith.constant 0 : i32
    %c0_i32_0 = arith.constant 0 : i32
    return %arg0, %c0_i32 : i32, i32
  }
  func.func @transform_2(%arg0: i32, %arg1: i32, %arg2: memref<8xi32, #tpu.memory_space<smem>>) -> (i32, i32, i32) {
    %0 = arith.index_cast %arg0 : i32 to index
    %1 = memref.load %arg2[%0] : memref<8xi32, #tpu.memory_space<smem>>
    %c0_i32 = arith.constant 0 : i32
    %c0_i32_0 = arith.constant 0 : i32
    return %1, %c0_i32, %arg1 : i32, i32, i32
  }
  func.func @transform_3(%arg0: i32, %arg1: i32, %arg2: memref<8xi32, #tpu.memory_space<smem>>) -> (i32, i32, i32) {
    %0 = arith.index_cast %arg0 : i32 to index
    %1 = memref.load %arg2[%0] : memref<8xi32, #tpu.memory_space<smem>>
    %c0_i32 = arith.constant 0 : i32
    %c0_i32_0 = arith.constant 0 : i32
    return %1, %c0_i32, %arg1 : i32, i32, i32
  }
  func.func @transform_4(%arg0: i32, %arg1: i32, %arg2: memref<8xi32, #tpu.memory_space<smem>>) -> (i32, i32, i32) {
    %0 = arith.index_cast %arg0 : i32 to index
    %1 = memref.load %arg2[%0] : memref<8xi32, #tpu.memory_space<smem>>
    %c0_i32 = arith.constant 0 : i32
    %c0_i32_0 = arith.constant 0 : i32
    return %1, %c0_i32, %arg1 : i32, i32, i32
  }
  func.func @transform_5(%arg0: i32, %arg1: i32, %arg2: memref<8xi32, #tpu.memory_space<smem>>) -> (i32, i32, i32) {
    %0 = arith.index_cast %arg0 : i32 to index
    %1 = memref.load %arg2[%0] : memref<8xi32, #tpu.memory_space<smem>>
    %c0_i32 = arith.constant 0 : i32
    %c0_i32_0 = arith.constant 0 : i32
    return %1, %c0_i32, %arg1 : i32, i32, i32
  }
  func.func @transform_6(%arg0: i32, %arg1: i32, %arg2: memref<8xi32, #tpu.memory_space<smem>>) -> (i32, i32, i32) {
    %0 = arith.index_cast %arg0 : i32 to index
    %1 = memref.load %arg2[%0] : memref<8xi32, #tpu.memory_space<smem>>
    %c0_i32 = arith.constant 0 : i32
    %c0_i32_0 = arith.constant 0 : i32
    return %1, %arg1, %c0_i32 : i32, i32, i32
  }
  func.func @transform_7(%arg0: i32, %arg1: i32, %arg2: memref<8xi32, #tpu.memory_space<smem>>) -> (i32, i32, i32) {
    %0 = arith.index_cast %arg0 : i32 to index
    %1 = memref.load %arg2[%0] : memref<8xi32, #tpu.memory_space<smem>>
    %c0_i32 = arith.constant 0 : i32
    %c0_i32_0 = arith.constant 0 : i32
    %c0_i32_1 = arith.constant 0 : i32
    return %1, %c0_i32, %c0_i32_0 : i32, i32, i32
  }
  func.func @transform_8(%arg0: i32, %arg1: i32, %arg2: memref<8xi32, #tpu.memory_space<smem>>) -> (i32, i32) {
    %c0_i32 = arith.constant 0 : i32
    %c0_i32_0 = arith.constant 0 : i32
    return %arg0, %c0_i32 : i32, i32
  }
}

</mosaic_0001>

<llo_original>
// kernel: custom-call
$region0: #{custom-call}
  %s0 = inlined_call_operand.vmem [shape: u32[8], index: 0, kind: output, shape index: {}]

// kernel: moe_forward.1
$region0: #{moe_forward.1}
  #allocation0 [shape = 'u32[]', space=smem, size = 0x4, offset = 0x4, fixed_abs, tag = 'smem constant byte address 0x4 - core index']
  #allocation1 [shape = 'u32[144,128]{1,0:T(1,128)}', space=vmem, size = 0x12000, scoped, tag = 'internal scratch']
  #allocation2 [shape = 's32[1]{0}', space=sflag, size = 0x4, scoped, tag = 'scoped memory for moe_forward.1']
  #allocation3 [shape = 'u8[512]{0}', space=smem, size = 0x200, scoped, tag = 'prefetched SMEM operand 0']
  %s0 = inlined_call_operand.vmem [shape: s32[8], index: 0, kind: input, shape index: {}]
  %s1 = inlined_call_operand.vmem [shape: f32[256,128], index: 1, kind: input, shape index: {}]
  %s2 = inlined_call_operand.vmem [shape: f32[256,1], index: 2, kind: input, shape index: {}]
  %s3 = inlined_call_operand.vmem [shape: f32[8,128,128], index: 3, kind: input, shape index: {}]
  %s4 = inlined_call_operand.vmem [shape: f32[8,1,128], index: 4, kind: input, shape index: {}]
  %s5 = inlined_call_operand.vmem [shape: f32[8,128,128], index: 5, kind: input, shape index: {}]
  %s6 = inlined_call_operand.vmem [shape: f32[8,1,128], index: 6, kind: input, shape index: {}]
  %s7 = inlined_call_operand.vmem [shape: f32[8,128,128], index: 7, kind: input, shape index: {}]
  %s8 = inlined_call_operand.vmem [shape: f32[8,1,128], index: 8, kind: input, shape index: {}]
  %s9 = inlined_call_operand.vmem [shape: f32[256,128], index: 9, kind: output, shape index: {}]
  %s10 = sld [smem:[#allocation0]]
  $region69: #{moe_forward.1} parent=0
    _
  %s12 = ssub.s32 1, %s10
  %s13 = scalar_select 0, %s12, %s10
  %s14 = sshll.u32 %s0, 4
  %s15 = int_to_ptr.vmem [resolvable:$true] %s14
  %17 = dma.vmem_to_smem %s15, 16, [#allocation3], [#allocation2]
  %18 = dma.done [#allocation2], 16
  %19 = sfence
  loop: start=0, step=1, limit=10
  $region2: #{moe_forward.1} parent=0 // loop_pre_header
    _
  $region3: #{moe_forward.1} parent=0 // loop_header
    %s21 = sphi 0, %s25
    %p22 = scmp.ge.s32.totalorder %s21, 10
    %s28 = sphi 0, %s40
    %s29 = sphi 0, %s36
    %s30 = sphi 0, %s28
    %s31 = sphi 0, %s29
    %s32 = sphi 0, %s30
    %s33 = sphi 0, %s31
    %s43 = sphi 0, %s45
    %s46 = sphi 0, %s43
    %s47 = sphi 0, %s46
    %s63 = sphi 0, %s47
    %s69 = sphi 0, %s71
    %s72 = sphi 0, %s69
    %s73 = sphi 0, %s72
    %s89 = sphi 0, %s73
    %s99 = sphi 0, %s101
    %s102 = sphi 0, %s99
    %s103 = sphi 0, %s102
    %s119 = sphi 0, %s103
    %s129 = sphi 0, %s131
    %s132 = sphi 0, %s129
    %s133 = sphi 0, %s132
    %s149 = sphi 0, %s133
    %s159 = sphi 0, %s161
    %s162 = sphi 0, %s159
    %s163 = sphi 0, %s162
    %s179 = sphi 0, %s163
    %s189 = sphi 0, %s191
    %s192 = sphi 0, %s189
    %s193 = sphi 0, %s192
    %s209 = sphi 0, %s193
    %s219 = sphi 0, %s221
    %s222 = sphi 0, %s219
    %s223 = sphi 0, %s222
    %s239 = sphi 0, %s223
    %s247 = sphi 0, %s249
    %s250 = sphi 0, %s247
    %s251 = sphi 0, %s250
    %s267 = sphi 0, %s251
    %s273 = sphi 0, %s275
    %s276 = sphi 0, %s273
    %s277 = sphi 0, %s276
    %s293 = sphi 0, %s277
  $region4: #{moe_forward.1} parent=0 // loop_header_branch
    %24 = sbr.rel (%p22) target = $region8
  $region5: #{moe_forward.1} parent=0 // loop_body
    %s26 = ssub.s32 %s21, 1
    %s27 = ssub.s32 %s21, 2
    %s34 = sadd.s32 1, %s29
    %p35 = scmp.ge.s32.totalorder %s34, 1
    %s36 = scalar_select %p35, 0, %s34
    %s37 = sadd.s32 1, %s28
    %s38 = scalar_select %p35, %s37, %s28
    %p39 = scmp.ge.s32.totalorder %s38, 8
    %s40 = scalar_select %p39, 0, %s38
    %s41 = ssub.s32 %s28, %s40
    %p42 = scmp.eq.s32.totalorder %s41, 0
    %s44 = sadd.s32 %s43, 1
    %s45 = scalar_select %p42, %s43, %s44
    %p48 = pneg %p42
    %p49 = scmp.eq.s32.totalorder %s21, 7
    %p50 = por %p48, %p49
    %p51 = scmp.ne.s32.totalorder %s43, %s46
    %p52 = scmp.eq.s32.totalorder %s21, 0
    %p53 = por %p51, %p52
    %p54 = scmp.ne.s32.totalorder %s43, %s46
    %p55 = scmp.eq.s32.totalorder %s26, 7
    %p56 = por %p54, %p55
    %p57 = scmp.ne.s32.totalorder %s46, %s47
    %p58 = scmp.eq.s32.totalorder %s26, 0
    %p59 = por %p57, %p58
    %p60 = scmp.ne.s32.totalorder %s46, %s47
    %p61 = scmp.eq.s32.totalorder %s27, 7
    %p62 = por %p60, %p61
    %p64 = scmp.ne.s32.totalorder %s47, %s63
    %p65 = scmp.eq.s32.totalorder %s27, 0
    %p66 = por %p64, %p65
    %s67 = ssub.s32 %s28, %s40
    %p68 = scmp.eq.s32.totalorder %s67, 0
    %s70 = sadd.s32 %s69, 1
    %s71 = scalar_select %p68, %s69, %s70
    %p74 = pneg %p68
    %p75 = scmp.eq.s32.totalorder %s21, 7
    %p76 = por %p74, %p75
    %p77 = scmp.ne.s32.totalorder %s69, %s72
    %p78 = scmp.eq.s32.totalorder %s21, 0
    %p79 = por %p77, %p78
    %p80 = scmp.ne.s32.totalorder %s69, %s72
    %p81 = scmp.eq.s32.totalorder %s26, 7
    %p82 = por %p80, %p81
    %p83 = scmp.ne.s32.totalorder %s72, %s73
    %p84 = scmp.eq.s32.totalorder %s26, 0
    %p85 = por %p83, %p84
    %p86 = scmp.ne.s32.totalorder %s72, %s73
    %p87 = scmp.eq.s32.totalorder %s27, 7
    %p88 = por %p86, %p87
    %p90 = scmp.ne.s32.totalorder %s73, %s89
    %p91 = scmp.eq.s32.totalorder %s27, 0
    %p92 = por %p90, %p91
    %s93 = sld [smem:[#allocation3 + %s28]]
    %s94 = sld [smem:[#allocation3 + %s40]]
    %s95 = ssub.s32 %s93, %s94
    %s96 = ssub.s32 %s29, %s36
    %s97 = sor.u32 %s95, %s96
    %p98 = scmp.eq.s32.totalorder %s97, 0
    %s100 = sadd.s32 %s99, 1
    %s101 = scalar_select %p98, %s99, %s100
    %p104 = pneg %p98
    %p105 = scmp.eq.s32.totalorder %s21, 7
    %p106 = por %p104, %p105
    %p107 = scmp.ne.s32.totalorder %s99, %s102
    %p108 = scmp.eq.s32.totalorder %s21, 0
    %p109 = por %p107, %p108
    %p110 = scmp.ne.s32.totalorder %s99, %s102
    %p111 = scmp.eq.s32.totalorder %s26, 7
    %p112 = por %p110, %p111
    %p113 = scmp.ne.s32.totalorder %s102, %s103
    %p114 = scmp.eq.s32.totalorder %s26, 0
    %p115 = por %p113, %p114
    %p116 = scmp.ne.s32.totalorder %s102, %s103
    %p117 = scmp.eq.s32.totalorder %s27, 7
    %p118 = por %p116, %p117
    %p120 = scmp.ne.s32.totalorder %s103, %s119
    %p121 = scmp.eq.s32.totalorder %s27, 0
    %p122 = por %p120, %p121
    %s123 = sld [smem:[#allocation3 + %s28]]
    %s124 = sld [smem:[#allocation3 + %s40]]
    %s125 = ssub.s32 %s123, %s124
    %s126 = ssub.s32 %s29, %s36
    %s127 = sor.u32 %s125, %s126
    %p128 = scmp.eq.s32.totalorder %s127, 0
    %s130 = sadd.s32 %s129, 1
    %s131 = scalar_select %p128, %s129, %s130
    %p134 = pneg %p128
    %p135 = scmp.eq.s32.totalorder %s21, 7
    %p136 = por %p134, %p135
    %p137 = scmp.ne.s32.totalorder %s129, %s132
    %p138 = scmp.eq.s32.totalorder %s21, 0
    %p139 = por %p137, %p138
    %p140 = scmp.ne.s32.totalorder %s129, %s132
    %p141 = scmp.eq.s32.totalorder %s26, 7
    %p142 = por %p140, %p141
    %p143 = scmp.ne.s32.totalorder %s132, %s133
    %p144 = scmp.eq.s32.totalorder %s26, 0
    %p145 = por %p143, %p144
    %p146 = scmp.ne.s32.totalorder %s132, %s133
    %p147 = scmp.eq.s32.totalorder %s27, 7
    %p148 = por %p146, %p147
    %p150 = scmp.ne.s32.totalorder %s133, %s149
    %p151 = scmp.eq.s32.totalorder %s27, 0
    %p152 = por %p150, %p151
    %s153 = sld [smem:[#allocation3 + %s28]]
    %s154 = sld [smem:[#allocation3 + %s40]]
    %s155 = ssub.s32 %s153, %s154
    %s156 = ssub.s32 %s29, %s36
    %s157 = sor.u32 %s155, %s156
    %p158 = scmp.eq.s32.totalorder %s157, 0
    %s160 = sadd.s32 %s159, 1
    %s161 = scalar_select %p158, %s159, %s160
    %p164 = pneg %p158
    %p165 = scmp.eq.s32.totalorder %s21, 7
    %p166 = por %p164, %p165
    %p167 = scmp.ne.s32.totalorder %s159, %s162
    %p168 = scmp.eq.s32.totalorder %s21, 0
    %p169 = por %p167, %p168
    %p170 = scmp.ne.s32.totalorder %s159, %s162
    %p171 = scmp.eq.s32.totalorder %s26, 7
    %p172 = por %p170, %p171
    %p173 = scmp.ne.s32.totalorder %s162, %s163
    %p174 = scmp.eq.s32.totalorder %s26, 0
    %p175 = por %p173, %p174
    %p176 = scmp.ne.s32.totalorder %s162, %s163
    %p177 = scmp.eq.s32.totalorder %s27, 7
    %p178 = por %p176, %p177
    %p180 = scmp.ne.s32.totalorder %s163, %s179
    %p181 = scmp.eq.s32.totalorder %s27, 0
    %p182 = por %p180, %p181
    %s183 = sld [smem:[#allocation3 + %s28]]
    %s184 = sld [smem:[#allocation3 + %s40]]
    %s185 = ssub.s32 %s183, %s184
    %s186 = ssub.s32 %s29, %s36
    %s187 = sor.u32 %s185, %s186
    %p188 = scmp.eq.s32.totalorder %s187, 0
    %s190 = sadd.s32 %s189, 1
    %s191 = scalar_select %p188, %s189, %s190
    %p194 = pneg %p188
    %p195 = scmp.eq.s32.totalorder %s21, 7
    %p196 = por %p194, %p195
    %p197 = scmp.ne.s32.totalorder %s189, %s192
    %p198 = scmp.eq.s32.totalorder %s21, 0
    %p199 = por %p197, %p198
    %p200 = scmp.ne.s32.totalorder %s189, %s192
    %p201 = scmp.eq.s32.totalorder %s26, 7
    %p202 = por %p200, %p201
    %p203 = scmp.ne.s32.totalorder %s192, %s193
    %p204 = scmp.eq.s32.totalorder %s26, 0
    %p205 = por %p203, %p204
    %p206 = scmp.ne.s32.totalorder %s192, %s193
    %p207 = scmp.eq.s32.totalorder %s27, 7
    %p208 = por %p206, %p207
    %p210 = scmp.ne.s32.totalorder %s193, %s209
    %p211 = scmp.eq.s32.totalorder %s27, 0
    %p212 = por %p210, %p211
    %s213 = sld [smem:[#allocation3 + %s28]]
    %s214 = sld [smem:[#allocation3 + %s40]]
    %s215 = ssub.s32 %s213, %s214
    %s216 = ssub.s32 %s29, %s36
    %s217 = sor.u32 %s215, %s216
    %p218 = scmp.eq.s32.totalorder %s217, 0
    %s220 = sadd.s32 %s219, 1
    %s221 = scalar_select %p218, %s219, %s220
    %p224 = pneg %p218
    %p225 = scmp.eq.s32.totalorder %s21, 7
    %p226 = por %p224, %p225
    %p227 = scmp.ne.s32.totalorder %s219, %s222
    %p228 = scmp.eq.s32.totalorder %s21, 0
    %p229 = por %p227, %p228
    %p230 = scmp.ne.s32.totalorder %s219, %s222
    %p231 = scmp.eq.s32.totalorder %s26, 7
    %p232 = por %p230, %p231
    %p233 = scmp.ne.s32.totalorder %s222, %s223
    %p234 = scmp.eq.s32.totalorder %s26, 0
    %p235 = por %p233, %p234
    %p236 = scmp.ne.s32.totalorder %s222, %s223
    %p237 = scmp.eq.s32.totalorder %s27, 7
    %p238 = por %p236, %p237
    %p240 = scmp.ne.s32.totalorder %s223, %s239
    %p241 = scmp.eq.s32.totalorder %s27, 0
    %p242 = por %p240, %p241
    %s243 = sld [smem:[#allocation3 + %s28]]
    %s244 = sld [smem:[#allocation3 + %s40]]
    %s245 = ssub.s32 %s243, %s244
    %p246 = scmp.eq.s32.totalorder %s245, 0
    %s248 = sadd.s32 %s247, 1
    %s249 = scalar_select %p246, %s247, %s248
    %p252 = pneg %p246
    %p253 = scmp.eq.s32.totalorder %s21, 7
    %p254 = por %p252, %p253
    %p255 = scmp.ne.s32.totalorder %s247, %s250
    %p256 = scmp.eq.s32.totalorder %s21, 0
    %p257 = por %p255, %p256
    %p258 = scmp.ne.s32.totalorder %s247, %s250
    %p259 = scmp.eq.s32.totalorder %s26, 7
    %p260 = por %p258, %p259
    %p261 = scmp.ne.s32.totalorder %s250, %s251
    %p262 = scmp.eq.s32.totalorder %s26, 0
    %p263 = por %p261, %p262
    %p264 = scmp.ne.s32.totalorder %s250, %s251
    %p265 = scmp.eq.s32.totalorder %s27, 7
    %p266 = por %p264, %p265
    %p268 = scmp.ne.s32.totalorder %s251, %s267
    %p269 = scmp.eq.s32.totalorder %s27, 0
    %p270 = por %p268, %p269
    %s271 = ssub.s32 %s28, %s40
    %p272 = scmp.eq.s32.totalorder %s271, 0
    %s274 = sadd.s32 %s273, 1
    %s275 = scalar_select %p272, %s273, %s274
    %p278 = pneg %p272
    %p279 = scmp.eq.s32.totalorder %s21, 7
    %p280 = por %p278, %p279
    %p281 = scmp.ne.s32.totalorder %s273, %s276
    %p282 = scmp.eq.s32.totalorder %s21, 0
    %p283 = por %p281, %p282
    %p284 = scmp.ne.s32.totalorder %s273, %s276
    %p285 = scmp.eq.s32.totalorder %s26, 7
    %p286 = por %p284, %p285
    %p287 = scmp.ne.s32.totalorder %s276, %s277
    %p288 = scmp.eq.s32.totalorder %s26, 0
    %p289 = por %p287, %p288
    %p290 = scmp.ne.s32.totalorder %s276, %s277
    %p291 = scmp.eq.s32.totalorder %s27, 7
    %p292 = por %p290, %p291
    %p294 = scmp.ne.s32.totalorder %s277, %s293
    %p295 = scmp.eq.s32.totalorder %s27, 0
    %p296 = por %p294, %p295
    %p297 = scmp.le.s32.totalorder 1, %s21
    %p298 = scmp.lt.s32.totalorder %s21, 9
    %p299 = pnand %p297, %p298
    %p300 = pneg %p299
    // Predicated region
    $region9: #{moe_forward.1} parent=5 // pred_check
      _
    $region10: #{moe_forward.1} parent=5 // pred_check_branch
      %302 = sbr.rel (%p299) target = $region12
    $region11: #{moe_forward.1} parent=5 // pred_region
      %s303 = ssub.s32 %s21, 1
    $region12: #{moe_forward.1} parent=5 // pred_fallthru
      _
    %p304 = scmp.lt.s32.totalorder %s21, 8
    // Predicated region
    $region13: #{moe_forward.1} parent=5 // pred_check
      %p305 = pneg %p304
    $region14: #{moe_forward.1} parent=5 // pred_check_branch
      %307 = sbr.rel (%p305) target = $region16
    $region15: #{moe_forward.1} parent=5 // pred_region
      // Predicated region
      $region17: #{moe_forward.1} parent=15 // pred_check
        %p308 = pneg %p53
      $region18: #{moe_forward.1} parent=15 // pred_check_branch
        %310 = sbr.rel (%p308) target = $region20
      $region19: #{moe_forward.1} parent=15 // pred_region
        %s311 = smul.u32 4, %s28
        %p312 = scmp.lt.s32.totalorder %s311, 31
        %s313 = scalar_select %p312, %s311, 31
        %s314 = smul.addr %s313, 8
        %s315 = scalar_lea.vmem %s1, %s314
        %s316 = smul.u32 4, %s28
      $region20: #{moe_forward.1} parent=15 // pred_fallthru
        _
      // Predicated region
      $region21: #{moe_forward.1} parent=15 // pred_check
        %p317 = pneg %p79
      $region22: #{moe_forward.1} parent=15 // pred_check_branch
        %319 = sbr.rel (%p317) target = $region24
      $region23: #{moe_forward.1} parent=15 // pred_region
        %s320 = smul.u32 4, %s28
        %p321 = scmp.lt.s32.totalorder %s320, 31
        %s322 = scalar_select %p321, %s320, 31
        %s323 = smul.addr %s322, 8
        %s324 = scalar_lea.vmem %s2, %s323
        %s325 = smul.u32 4, %s28
      $region24: #{moe_forward.1} parent=15 // pred_fallthru
        _
      // Predicated region
      $region25: #{moe_forward.1} parent=15 // pred_check
        %p326 = pneg %p109
      $region26: #{moe_forward.1} parent=15 // pred_check_branch
        %328 = sbr.rel (%p326) target = $region28
      $region27: #{moe_forward.1} parent=15 // pred_region
        %s329 = sld [smem:[#allocation3 + %s28]]
        %p330 = scmp.lt.s32.totalorder %s329, 7
        %s331 = scalar_select %p330, %s329, 7
        %p332 = scmp.lt.s32.totalorder %s29, 0
        %s333 = scalar_select %p332, %s29, 0
        %s334 = smul.addr %s331, 16
        %s335 = sadd.s32 %s333, %s334
        %s336 = smul.addr %s335, 8
        %s337 = scalar_lea.vmem %s3, %s336
        %s338 = sld [smem:[#allocation3 + %s28]]
      $region28: #{moe_forward.1} parent=15 // pred_fallthru
        _
      // Predicated region
      $region29: #{moe_forward.1} parent=15 // pred_check
        %p339 = pneg %p139
      $region30: #{moe_forward.1} parent=15 // pred_check_branch
        %341 = sbr.rel (%p339) target = $region32
      $region31: #{moe_forward.1} parent=15 // pred_region
        %s342 = sld [smem:[#allocation3 + %s28]]
        %p343 = scmp.lt.s32.totalorder %s342, 7
        %s344 = scalar_select %p343, %s342, 7
        %p345 = scmp.lt.s32.totalorder %s29, 0
        %s346 = scalar_select %p345, %s29, 0
        %s347 = sadd.s32 %s346, %s344
        %s348 = scalar_lea.vmem %s4, %s347
        %s349 = sld [smem:[#allocation3 + %s28]]
      $region32: #{moe_forward.1} parent=15 // pred_fallthru
        _
      // Predicated region
      $region33: #{moe_forward.1} parent=15 // pred_check
        %p350 = pneg %p169
      $region34: #{moe_forward.1} parent=15 // pred_check_branch
        %352 = sbr.rel (%p350) target = $region36
      $region35: #{moe_forward.1} parent=15 // pred_region
        %s353 = sld [smem:[#allocation3 + %s28]]
        %p354 = scmp.lt.s32.totalorder %s353, 7
        %s355 = scalar_select %p354, %s353, 7
        %p356 = scmp.lt.s32.totalorder %s29, 0
        %s357 = scalar_select %p356, %s29, 0
        %s358 = smul.addr %s355, 16
        %s359 = sadd.s32 %s357, %s358
        %s360 = smul.addr %s359, 8
        %s361 = scalar_lea.vmem %s5, %s360
        %s362 = sld [smem:[#allocation3 + %s28]]
      $region36: #{moe_forward.1} parent=15 // pred_fallthru
        _
      // Predicated region
      $region37: #{moe_forward.1} parent=15 // pred_check
        %p363 = pneg %p199
      $region38: #{moe_forward.1} parent=15 // pred_check_branch
        %365 = sbr.rel (%p363) target = $region40
      $region39: #{moe_forward.1} parent=15 // pred_region
        %s366 = sld [smem:[#allocation3 + %s28]]
        %p367 = scmp.lt.s32.totalorder %s366, 7
        %s368 = scalar_select %p367, %s366, 7
        %p369 = scmp.lt.s32.totalorder %s29, 0
        %s370 = scalar_select %p369, %s29, 0
        %s371 = sadd.s32 %s370, %s368
        %s372 = scalar_lea.vmem %s6, %s371
        %s373 = sld [smem:[#allocation3 + %s28]]
      $region40: #{moe_forward.1} parent=15 // pred_fallthru
        _
      // Predicated region
      $region41: #{moe_forward.1} parent=15 // pred_check
        %p374 = pneg %p229
      $region42: #{moe_forward.1} parent=15 // pred_check_branch
        %376 = sbr.rel (%p374) target = $region44
      $region43: #{moe_forward.1} parent=15 // pred_region
        %s377 = sld [smem:[#allocation3 + %s28]]
        %s378 = smul.u32 16, %s29
        %p379 = scmp.lt.s32.totalorder %s377, 7
        %s380 = scalar_select %p379, %s377, 7
        %p381 = scmp.lt.s32.totalorder %s378, 15
        %s382 = scalar_select %p381, %s378, 15
        %s383 = smul.addr %s380, 16
        %s384 = sadd.s32 %s382, %s383
        %s385 = smul.addr %s384, 8
        %s386 = scalar_lea.vmem %s7, %s385
        %s387 = sld [smem:[#allocation3 + %s28]]
        %s388 = smul.u32 16, %s29
      $region44: #{moe_forward.1} parent=15 // pred_fallthru
        _
      // Predicated region
      $region45: #{moe_forward.1} parent=15 // pred_check
        %p389 = pneg %p257
      $region46: #{moe_forward.1} parent=15 // pred_check_branch
        %391 = sbr.rel (%p389) target = $region48
      $region47: #{moe_forward.1} parent=15 // pred_region
        %s392 = sld [smem:[#allocation3 + %s28]]
        %p393 = scmp.lt.s32.totalorder %s392, 7
        %s394 = scalar_select %p393, %s392, 7
        %s395 = scalar_lea.vmem %s8, %s394
        %s396 = sld [smem:[#allocation3 + %s28]]
      $region48: #{moe_forward.1} parent=15 // pred_fallthru
        _
    $region16: #{moe_forward.1} parent=5 // pred_fallthru
      _
    %p397 = scmp.le.s32.totalorder 1, %s21
    %p398 = scmp.lt.s32.totalorder %s21, 9
    %p399 = pnand %p397, %p398
    %p400 = pneg %p399
    // Predicated region
    $region49: #{moe_forward.1} parent=5 // pred_check
      _
    $region50: #{moe_forward.1} parent=5 // pred_check_branch
      %402 = sbr.rel (%p399) target = $region52
    $region51: #{moe_forward.1} parent=5 // pred_region
      %s403 = ssub.s32 %s21, 1
      %s404 = smul.u32 4, %s30
      %p405 = scmp.lt.s32.totalorder %s404, 31
      %s406 = scalar_select %p405, %s404, 31
      %s407 = smul.addr %s406, 8
      %s408 = scalar_lea.vmem %s1, %s407
      %p409 = pneg %p59
      %p410 = pneg %p56
      %s411 = smul.u32 4, %s30
      %p412 = scmp.lt.s32.totalorder %s411, 31
      %s413 = scalar_select %p412, %s411, 31
      %s414 = smul.addr %s413, 8
      %s415 = scalar_lea.vmem %s2, %s414
      %p416 = pneg %p85
      %p417 = pneg %p82
      %s418 = sld [smem:[#allocation3 + %s30]]
      %p419 = scmp.lt.s32.totalorder %s418, 7
      %s420 = scalar_select %p419, %s418, 7
      %p421 = scmp.lt.s32.totalorder %s31, 0
      %s422 = scalar_select %p421, %s31, 0
      %s423 = smul.addr %s420, 16
      %s424 = sadd.s32 %s422, %s423
      %s425 = smul.addr %s424, 8
      %s426 = scalar_lea.vmem %s3, %s425
      %p427 = pneg %p115
      %p428 = pneg %p112
      %s429 = sld [smem:[#allocation3 + %s30]]
      %p430 = scmp.lt.s32.totalorder %s429, 7
      %s431 = scalar_select %p430, %s429, 7
      %p432 = scmp.lt.s32.totalorder %s31, 0
      %s433 = scalar_select %p432, %s31, 0
      %s434 = sadd.s32 %s433, %s431
      %s435 = scalar_lea.vmem %s4, %s434
      %p436 = pneg %p145
      %p437 = pneg %p142
      %s438 = sld [smem:[#allocation3 + %s30]]
      %p439 = scmp.lt.s32.totalorder %s438, 7
      %s440 = scalar_select %p439, %s438, 7
      %p441 = scmp.lt.s32.totalorder %s31, 0
      %s442 = scalar_select %p441, %s31, 0
      %s443 = smul.addr %s440, 16
      %s444 = sadd.s32 %s442, %s443
      %s445 = smul.addr %s444, 8
      %s446 = scalar_lea.vmem %s5, %s445
      %p447 = pneg %p175
      %p448 = pneg %p172
      %s449 = sld [smem:[#allocation3 + %s30]]
      %p450 = scmp.lt.s32.totalorder %s449, 7
      %s451 = scalar_select %p450, %s449, 7
      %p452 = scmp.lt.s32.totalorder %s31, 0
      %s453 = scalar_select %p452, %s31, 0
      %s454 = sadd.s32 %s453, %s451
      %s455 = scalar_lea.vmem %s6, %s454
      %p456 = pneg %p205
      %p457 = pneg %p202
      %s458 = sld [smem:[#allocation3 + %s30]]
      %s459 = smul.u32 16, %s31
      %p460 = scmp.lt.s32.totalorder %s458, 7
      %s461 = scalar_select %p460, %s458, 7
      %p462 = scmp.lt.s32.totalorder %s459, 15
      %s463 = scalar_select %p462, %s459, 15
      %s464 = smul.addr %s461, 16
      %s465 = sadd.s32 %s463, %s464
      %s466 = smul.addr %s465, 8
      %s467 = scalar_lea.vmem %s7, %s466
      %p468 = pneg %p235
      %p469 = pneg %p232
      %s470 = sld [smem:[#allocation3 + %s30]]
      %p471 = scmp.lt.s32.totalorder %s470, 7
      %s472 = scalar_select %p471, %s470, 7
      %s473 = scalar_lea.vmem %s8, %s472
      %p474 = pneg %p263
      %p475 = pneg %p260
      %p476 = pneg %p289
      %p477 = pneg %p286
      %s478 = smul.u32 4, %s30
      %p479 = scmp.lt.s32.totalorder %s478, 31
      %s480 = scalar_select %p479, %s478, 31
      %s481 = smul.addr %s480, 8
      %s482 = scalar_lea.vmem %s9, %s481
      %s483 = smul.u32 4, %s30
      %p484 = scmp.lt.s32.totalorder %s483, 31
      %s485 = scalar_select %p484, %s483, 31
      %s486 = smul.addr %s485, 8
      %s487 = scalar_lea.vmem %s1, %s486
      %s488 = smul.u32 4, %s30
      %s489 = smul.u32 4, %s30
      %p490 = scmp.lt.s32.totalorder %s489, 31
      %s491 = scalar_select %p490, %s489, 31
      %s492 = smul.addr %s491, 8
      %s493 = scalar_lea.vmem %s2, %s492
      %s494 = smul.u32 4, %s30
      %s495 = sld [smem:[#allocation3 + %s30]]
      %p496 = scmp.lt.s32.totalorder %s495, 7
      %s497 = scalar_select %p496, %s495, 7
      %p498 = scmp.lt.s32.totalorder %s31, 0
      %s499 = scalar_select %p498, %s31, 0
      %s500 = smul.addr %s497, 16
      %s501 = sadd.s32 %s499, %s500
      %s502 = smul.addr %s501, 8
      %s503 = scalar_lea.vmem %s3, %s502
      %s504 = sld [smem:[#allocation3 + %s30]]
      %s505 = sld [smem:[#allocation3 + %s30]]
      %p506 = scmp.lt.s32.totalorder %s505, 7
      %s507 = scalar_select %p506, %s505, 7
      %p508 = scmp.lt.s32.totalorder %s31, 0
      %s509 = scalar_select %p508, %s31, 0
      %s510 = sadd.s32 %s509, %s507
      %s511 = scalar_lea.vmem %s4, %s510
      %s512 = sld [smem:[#allocation3 + %s30]]
      %s513 = sld [smem:[#allocation3 + %s30]]
      %p514 = scmp.lt.s32.totalorder %s513, 7
      %s515 = scalar_select %p514, %s513, 7
      %p516 = scmp.lt.s32.totalorder %s31, 0
      %s517 = scalar_select %p516, %s31, 0
      %s518 = smul.addr %s515, 16
      %s519 = sadd.s32 %s517, %s518
      %s520 = smul.addr %s519, 8
      %s521 = scalar_lea.vmem %s5, %s520
      %s522 = sld [smem:[#allocation3 + %s30]]
      %s523 = sld [smem:[#allocation3 + %s30]]
      %p524 = scmp.lt.s32.totalorder %s523, 7
      %s525 = scalar_select %p524, %s523, 7
      %p526 = scmp.lt.s32.totalorder %s31, 0
      %s527 = scalar_select %p526, %s31, 0
      %s528 = sadd.s32 %s527, %s525
      %s529 = scalar_lea.vmem %s6, %s528
      %s530 = sld [smem:[#allocation3 + %s30]]
      %s531 = sld [smem:[#allocation3 + %s30]]
      %s532 = smul.u32 16, %s31
      %p533 = scmp.lt.s32.totalorder %s531, 7
      %s534 = scalar_select %p533, %s531, 7
      %p535 = scmp.lt.s32.totalorder %s532, 15
      %s536 = scalar_select %p535, %s532, 15
      %s537 = smul.addr %s534, 16
      %s538 = sadd.s32 %s536, %s537
      %s539 = smul.addr %s538, 8
      %s540 = scalar_lea.vmem %s7, %s539
      %s541 = sld [smem:[#allocation3 + %s30]]
      %s542 = smul.u32 16, %s31
      %s543 = sld [smem:[#allocation3 + %s30]]
      %p544 = scmp.lt.s32.totalorder %s543, 7
      %s545 = scalar_select %p544, %s543, 7
      %s546 = scalar_lea.vmem %s8, %s545
      %s547 = sld [smem:[#allocation3 + %s30]]
      %s548 = smul.u32 4, %s30
      %p549 = scmp.lt.s32.totalorder %s548, 31
      %s550 = scalar_select %p549, %s548, 31
      %s551 = smul.addr %s550, 8
      %s552 = scalar_lea.vmem %s9, %s551
      %s553 = smul.u32 4, %s30
      %v554 = vld [vmem:[%s493] sm:$0xff]
      %v555 = vld [vmem:[%s493 + $0x8] sm:$0xff]
      %v556 = vld [vmem:[%s493 + $0x10] sm:$0xff]
      %v557 = vld [vmem:[%s493 + $0x18] sm:$0xff]
      %p558 = scmp.eq.s32.totalorder %s31, 0
      // Predicated region
      $region53: #{moe_forward.1} parent=51 // pred_check
        %p559 = pneg %p558
      $region54: #{moe_forward.1} parent=51 // pred_check_branch
        %561 = sbr.rel (%p559) target = $region56
      $region55: #{moe_forward.1} parent=51 // pred_region
        %v562 = vld [vmem:[%s546] sm:$0x1]
        %564 = vset.pattern.permute.xlu0 0
        %565 = vperm.xlu0 %564, %v554
        %v566 = vpop.permute.xlu0 %565
        %569 = vset.pattern.permute.xlu0 0
        %570 = vperm.xlu0 %569, %v555
        %v571 = vpop.permute.xlu0 %570
        %574 = vset.pattern.permute.xlu0 0
        %575 = vperm.xlu0 %574, %v556
        %v576 = vpop.permute.xlu0 %575
        %579 = vset.pattern.permute.xlu0 0
        %580 = vperm.xlu0 %579, %v557
        %v581 = vpop.permute.xlu0 %580
        %v584 = vlaneseq
        %v585 = vshrl.u32 %v584, 7
        %v586 = vsub.s32 0, %v585
        %v587 = vrot.slane %v562, %v586
        %v589 = vmul.f32 %v566, %v587
        %v590 = vmul.f32 %v571, %v587
        %v591 = vmul.f32 %v576, %v587
        %v592 = vmul.f32 %v581, %v587
        %593 = vst [vmem:[%s552] sm:$0xff] %v589
        %594 = vst [vmem:[%s552 + $0x8] sm:$0xff] %v590
        %595 = vst [vmem:[%s552 + $0x10] sm:$0xff] %v591
        %596 = vst [vmem:[%s552 + $0x18] sm:$0xff] %v592
      $region56: #{moe_forward.1} parent=51 // pred_fallthru
        _
      %v597 = vld [vmem:[%s487] sm:$0xff]
      %v598 = vld [vmem:[%s487 + $0x8] sm:$0xff]
      %v599 = vld [vmem:[%s487 + $0x10] sm:$0xff]
      %v600 = vld [vmem:[%s487 + $0x18] sm:$0xff]
      %v601 = vld [vmem:[%s503] sm:$0xff]
      %v602 = vld [vmem:[%s503 + $0x8] sm:$0xff]
      %v603 = vld [vmem:[%s503 + $0x10] sm:$0xff]
      %v604 = vld [vmem:[%s503 + $0x18] sm:$0xff]
      %v605 = vld [vmem:[%s503 + $0x20] sm:$0xff]
      %v606 = vld [vmem:[%s503 + $0x28] sm:$0xff]
      %v607 = vld [vmem:[%s503 + $0x30] sm:$0xff]
      %v608 = vld [vmem:[%s503 + $0x38] sm:$0xff]
      %v609 = vld [vmem:[%s503 + $0x40] sm:$0xff]
      %v610 = vld [vmem:[%s503 + $0x48] sm:$0xff]
      %v611 = vld [vmem:[%s503 + $0x50] sm:$0xff]
      %v612 = vld [vmem:[%s503 + $0x58] sm:$0xff]
      %v613 = vld [vmem:[%s503 + $0x60] sm:$0xff]
      %v614 = vld [vmem:[%s503 + $0x68] sm:$0xff]
      %v615 = vld [vmem:[%s503 + $0x70] sm:$0xff]
      %v616 = vld [vmem:[%s503 + $0x78] sm:$0xff]
      %v617 = vld [vmem:[%s511] sm:$0x1]
      %v619 = vlaneseq
      %v620 = vshrl.u32 %v619, 7
      %v621 = vsub.s32 0, %v620
      %v622 = vrot.slane %v617, %v621
      %624 = vmatprep.subr.mxu0 0.0
      %625 = vmatpush1.msra.mxu0 %v616
      %626 = vmatprep.subr.mxu0 0.0
      %627 = vmatpush1.msra.mxu0 %v615
      %628 = vmatprep.subr.mxu0 0.0
      %629 = vmatpush1.msra.mxu0 %v614
      %630 = vmatprep.subr.mxu0 0.0
      %631 = vmatpush1.msra.mxu0 %v613
      %632 = vmatprep.subr.mxu0 0.0
      %633 = vmatpush1.msra.mxu0 %v612
      %634 = vmatprep.subr.mxu0 0.0
      %635 = vmatpush1.msra.mxu0 %v611
      %636 = vmatprep.subr.mxu0 0.0
      %637 = vmatpush1.msra.mxu0 %v610
      %638 = vmatprep.subr.mxu0 0.0
      %639 = vmatpush1.msra.mxu0 %v609
      %640 = vmatprep.subr.mxu0 0.0
      %641 = vmatpush1.msra.mxu0 %v608
      %642 = vmatprep.subr.mxu0 0.0
      %643 = vmatpush1.msra.mxu0 %v607
      %644 = vmatprep.subr.mxu0 0.0
      %645 = vmatpush1.msra.mxu0 %v606
      %646 = vmatprep.subr.mxu0 0.0
      %647 = vmatpush1.msra.mxu0 %v605
      %648 = vmatprep.subr.mxu0 0.0
      %649 = vmatpush1.msra.mxu0 %v604
      %650 = vmatprep.subr.mxu0 0.0
      %651 = vmatpush1.msra.mxu0 %v603
      %652 = vmatprep.subr.mxu0 0.0
      %653 = vmatpush1.msra.mxu0 %v602
      %654 = vmatprep.subr.mxu0 0.0
      %655 = vmatpush1.msra.mxu0 %v601
      %656 = vmatprep.subr.mxu0 0.0
      %657 = vmatpush2.msra.mxu0 0.0
      %658 = vmatprep.subr.mxu0 0.0
      %659 = vmatpush2.msra.mxu0 0.0
      %660 = vmatprep.subr.mxu0 0.0
      %661 = vmatpush2.msra.mxu0 0.0
      %662 = vmatprep.subr.mxu0 0.0
      %663 = vmatpush2.msra.mxu0 0.0
      %664 = vmatprep.subr.mxu0 0.0
      %665 = vmatpush2.msra.mxu0 0.0
      %666 = vmatprep.subr.mxu0 0.0
      %667 = vmatpush2.msra.mxu0 0.0
      %668 = vmatprep.subr.mxu0 0.0
      %669 = vmatpush2.msra.mxu0 0.0
      %670 = vmatprep.subr.mxu0 0.0
      %671 = vmatpush2.msra.mxu0 0.0
      %672 = vmatprep.subr.mxu0 0.0
      %673 = vmatpush2.msra.mxu0 0.0
      %674 = vmatprep.subr.mxu0 0.0
      %675 = vmatpush2.msra.mxu0 0.0
      %676 = vmatprep.subr.mxu0 0.0
      %677 = vmatpush2.msra.mxu0 0.0
      %678 = vmatprep.subr.mxu0 0.0
      %679 = vmatpush2.msra.mxu0 0.0
      %680 = vmatprep.subr.mxu0 0.0
      %681 = vmatpush2.msra.mxu0 0.0
      %682 = vmatprep.subr.mxu0 0.0
      %683 = vmatpush2.msra.mxu0 0.0
      %684 = vmatprep.subr.mxu0 0.0
      %685 = vmatpush2.msra.mxu0 0.0
      %686 = vmatprep.subr.mxu0 0.0
      %687 = vmatpush2.msra.mxu0 0.0
      %688 = vmatprep.mubr.f32.mxu0 0.0
      %689 = vmatmul.mubr.f32.gmra.mxu0 %v597
      %v690 = vpop.f32.mrf.mxu0
      %v691 = vadd.f32 %v622, %v690
      %v692 = vpop.f32.mrf.mxu0
      %693 = vmatprep.mubr.f32.mxu0 0.0
      %694 = vmatmul.mubr.f32.gmra.mxu0 %v598
      %v695 = vpop.f32.mrf.mxu0
      %v696 = vadd.f32 %v622, %v695
      %v697 = vpop.f32.mrf.mxu0
      %698 = vmatprep.mubr.f32.mxu0 0.0
      %699 = vmatmul.mubr.f32.gmra.mxu0 %v599
      %v700 = vpop.f32.mrf.mxu0
      %v701 = vadd.f32 %v622, %v700
      %v702 = vpop.f32.mrf.mxu0
      %703 = vmatprep.mubr.f32.mxu0 0.0
      %704 = vmatmul.mubr.f32.gmra.mxu0 %v600
      %v705 = vpop.f32.mrf.mxu0
      %v706 = vadd.f32 %v622, %v705
      %v707 = vpop.f32.mrf.mxu0
      %708 = vdwg.mxu0
      %v709 = vld [vmem:[%s521] sm:$0xff]
      %v710 = vld [vmem:[%s521 + $0x8] sm:$0xff]
      %v711 = vld [vmem:[%s521 + $0x10] sm:$0xff]
      %v712 = vld [vmem:[%s521 + $0x18] sm:$0xff]
      %v713 = vld [vmem:[%s521 + $0x20] sm:$0xff]
      %v714 = vld [vmem:[%s521 + $0x28] sm:$0xff]
      %v715 = vld [vmem:[%s521 + $0x30] sm:$0xff]
      %v716 = vld [vmem:[%s521 + $0x38] sm:$0xff]
      %v717 = vld [vmem:[%s521 + $0x40] sm:$0xff]
      %v718 = vld [vmem:[%s521 + $0x48] sm:$0xff]
      %v719 = vld [vmem:[%s521 + $0x50] sm:$0xff]
      %v720 = vld [vmem:[%s521 + $0x58] sm:$0xff]
      %v721 = vld [vmem:[%s521 + $0x60] sm:$0xff]
      %v722 = vld [vmem:[%s521 + $0x68] sm:$0xff]
      %v723 = vld [vmem:[%s521 + $0x70] sm:$0xff]
      %v724 = vld [vmem:[%s521 + $0x78] sm:$0xff]
      %v725 = vld [vmem:[%s529] sm:$0x1]
      %v727 = vlaneseq
      %v728 = vshrl.u32 %v727, 7
      %v729 = vsub.s32 0, %v728
      %v730 = vrot.slane %v725, %v729
      %732 = vmatprep.subr.mxu0 0.0
      %733 = vmatpush1.msra.mxu0 %v724
      %734 = vmatprep.subr.mxu0 0.0
      %735 = vmatpush1.msra.mxu0 %v723
      %736 = vmatprep.subr.mxu0 0.0
      %737 = vmatpush1.msra.mxu0 %v722
      %738 = vmatprep.subr.mxu0 0.0
      %739 = vmatpush1.msra.mxu0 %v721
      %740 = vmatprep.subr.mxu0 0.0
      %741 = vmatpush1.msra.mxu0 %v720
      %742 = vmatprep.subr.mxu0 0.0
      %743 = vmatpush1.msra.mxu0 %v719
      %744 = vmatprep.subr.mxu0 0.0
      %745 = vmatpush1.msra.mxu0 %v718
      %746 = vmatprep.subr.mxu0 0.0
      %747 = vmatpush1.msra.mxu0 %v717
      %748 = vmatprep.subr.mxu0 0.0
      %749 = vmatpush1.msra.mxu0 %v716
      %750 = vmatprep.subr.mxu0 0.0
      %751 = vmatpush1.msra.mxu0 %v715
      %752 = vmatprep.subr.mxu0 0.0
      %753 = vmatpush1.msra.mxu0 %v714
      %754 = vmatprep.subr.mxu0 0.0
      %755 = vmatpush1.msra.mxu0 %v713
      %756 = vmatprep.subr.mxu0 0.0
      %757 = vmatpush1.msra.mxu0 %v712
      %758 = vmatprep.subr.mxu0 0.0
      %759 = vmatpush1.msra.mxu0 %v711
      %760 = vmatprep.subr.mxu0 0.0
      %761 = vmatpush1.msra.mxu0 %v710
      %762 = vmatprep.subr.mxu0 0.0
      %763 = vmatpush1.msra.mxu0 %v709
      %764 = vmatprep.subr.mxu0 0.0
      %765 = vmatpush2.msra.mxu0 0.0
      %766 = vmatprep.subr.mxu0 0.0
      %767 = vmatpush2.msra.mxu0 0.0
      %768 = vmatprep.subr.mxu0 0.0
      %769 = vmatpush2.msra.mxu0 0.0
      %770 = vmatprep.subr.mxu0 0.0
      %771 = vmatpush2.msra.mxu0 0.0
      %772 = vmatprep.subr.mxu0 0.0
      %773 = vmatpush2.msra.mxu0 0.0
      %774 = vmatprep.subr.mxu0 0.0
      %775 = vmatpush2.msra.mxu0 0.0
      %776 = vmatprep.subr.mxu0 0.0
      %777 = vmatpush2.msra.mxu0 0.0
      %778 = vmatprep.subr.mxu0 0.0
      %779 = vmatpush2.msra.mxu0 0.0
      %780 = vmatprep.subr.mxu0 0.0
      %781 = vmatpush2.msra.mxu0 0.0
      %782 = vmatprep.subr.mxu0 0.0
      %783 = vmatpush2.msra.mxu0 0.0
      %784 = vmatprep.subr.mxu0 0.0
      %785 = vmatpush2.msra.mxu0 0.0
      %786 = vmatprep.subr.mxu0 0.0
      %787 = vmatpush2.msra.mxu0 0.0
      %788 = vmatprep.subr.mxu0 0.0
      %789 = vmatpush2.msra.mxu0 0.0
      %790 = vmatprep.subr.mxu0 0.0
      %791 = vmatpush2.msra.mxu0 0.0
      %792 = vmatprep.subr.mxu0 0.0
      %793 = vmatpush2.msra.mxu0 0.0
      %794 = vmatprep.subr.mxu0 0.0
      %795 = vmatpush2.msra.mxu0 0.0
      %796 = vmatprep.mubr.f32.mxu0 0.0
      %797 = vmatmul.mubr.f32.gmra.mxu0 %v597
      %v798 = vpop.f32.mrf.mxu0
      %v799 = vadd.f32 %v730, %v798
      %v800 = vpop.f32.mrf.mxu0
      %801 = vmatprep.mubr.f32.mxu0 0.0
      %802 = vmatmul.mubr.f32.gmra.mxu0 %v598
      %v803 = vpop.f32.mrf.mxu0
      %v804 = vadd.f32 %v730, %v803
      %v805 = vpop.f32.mrf.mxu0
      %806 = vmatprep.mubr.f32.mxu0 0.0
      %807 = vmatmul.mubr.f32.gmra.mxu0 %v599
      %v808 = vpop.f32.mrf.mxu0
      %v809 = vadd.f32 %v730, %v808
      %v810 = vpop.f32.mrf.mxu0
      %811 = vmatprep.mubr.f32.mxu0 0.0
      %812 = vmatmul.mubr.f32.gmra.mxu0 %v600
      %v813 = vpop.f32.mrf.mxu0
      %v814 = vadd.f32 %v730, %v813
      %v815 = vpop.f32.mrf.mxu0
      %816 = vdwg.mxu0
      %v817 = vxor.u32 %v691, 2147483648
      %v818 = vxor.u32 %v696, 2147483648
      %v819 = vxor.u32 %v701, 2147483648
      %v820 = vxor.u32 %v706, 2147483648
      %v821 = vmul.f32 %v817, 1.442695
      %v822 = vpow.pop %v821
      %v823 = vmul.f32 %v818, 1.442695
      %v824 = vpow.pop %v823
      %v825 = vmul.f32 %v819, 1.442695
      %v826 = vpow.pop %v825
      %v827 = vmul.f32 %v820, 1.442695
      %v828 = vpow.pop %v827
      %v829 = vadd.f32 %v822, 1.0
      %v830 = vadd.f32 %v824, 1.0
      %v831 = vadd.f32 %v826, 1.0
      %v832 = vadd.f32 %v828, 1.0
      %v833 = vrcp.pop %v829
      %v834 = vmul.f32 1.0, %v833
      %v835 = vrcp.pop %v830
      %v836 = vmul.f32 1.0, %v835
      %v837 = vrcp.pop %v831
      %v838 = vmul.f32 1.0, %v837
      %v839 = vrcp.pop %v832
      %v840 = vmul.f32 1.0, %v839
      %v841 = vmul.f32 %v691, %v834
      %v842 = vmul.f32 %v696, %v836
      %v843 = vmul.f32 %v701, %v838
      %v844 = vmul.f32 %v706, %v840
      %v845 = vmul.f32 %v841, %v799
      %v846 = vmul.f32 %v842, %v804
      %v847 = vmul.f32 %v843, %v809
      %v848 = vmul.f32 %v844, %v814
      %850 = vset.pattern.permute.xlu0 0
      %851 = vperm.xlu0 %850, %v554
      %v852 = vpop.permute.xlu0 %851
      %855 = vset.pattern.permute.xlu0 0
      %856 = vperm.xlu0 %855, %v555
      %v857 = vpop.permute.xlu0 %856
      %860 = vset.pattern.permute.xlu0 0
      %861 = vperm.xlu0 %860, %v556
      %v862 = vpop.permute.xlu0 %861
      %865 = vset.pattern.permute.xlu0 0
      %866 = vperm.xlu0 %865, %v557
      %v867 = vpop.permute.xlu0 %866
      %v869 = vmul.f32 %v845, %v852
      %v870 = vmul.f32 %v846, %v857
      %v871 = vmul.f32 %v847, %v862
      %v872 = vmul.f32 %v848, %v867
      %v873 = vld [vmem:[%s552] sm:$0xff]
      %v874 = vld [vmem:[%s552 + $0x8] sm:$0xff]
      %v875 = vld [vmem:[%s552 + $0x10] sm:$0xff]
      %v876 = vld [vmem:[%s552 + $0x18] sm:$0xff]
      %v877 = vld [vmem:[%s540] sm:$0xff]
      %v878 = vld [vmem:[%s540 + $0x8] sm:$0xff]
      %v879 = vld [vmem:[%s540 + $0x10] sm:$0xff]
      %v880 = vld [vmem:[%s540 + $0x18] sm:$0xff]
      %v881 = vld [vmem:[%s540 + $0x20] sm:$0xff]
      %v882 = vld [vmem:[%s540 + $0x28] sm:$0xff]
      %v883 = vld [vmem:[%s540 + $0x30] sm:$0xff]
      %v884 = vld [vmem:[%s540 + $0x38] sm:$0xff]
      %v885 = vld [vmem:[%s540 + $0x40] sm:$0xff]
      %v886 = vld [vmem:[%s540 + $0x48] sm:$0xff]
      %v887 = vld [vmem:[%s540 + $0x50] sm:$0xff]
      %v888 = vld [vmem:[%s540 + $0x58] sm:$0xff]
      %v889 = vld [vmem:[%s540 + $0x60] sm:$0xff]
      %v890 = vld [vmem:[%s540 + $0x68] sm:$0xff]
      %v891 = vld [vmem:[%s540 + $0x70] sm:$0xff]
      %v892 = vld [vmem:[%s540 + $0x78] sm:$0xff]
      %893 = vmatprep.subr.mxu0 0.0
      %894 = vmatpush1.msra.mxu0 %v892
      %895 = vmatprep.subr.mxu0 0.0
      %896 = vmatpush1.msra.mxu0 %v891
      %897 = vmatprep.subr.mxu0 0.0
      %898 = vmatpush1.msra.mxu0 %v890
      %899 = vmatprep.subr.mxu0 0.0
      %900 = vmatpush1.msra.mxu0 %v889
      %901 = vmatprep.subr.mxu0 0.0
      %902 = vmatpush1.msra.mxu0 %v888
      %903 = vmatprep.subr.mxu0 0.0
      %904 = vmatpush1.msra.mxu0 %v887
      %905 = vmatprep.subr.mxu0 0.0
      %906 = vmatpush1.msra.mxu0 %v886
      %907 = vmatprep.subr.mxu0 0.0
      %908 = vmatpush1.msra.mxu0 %v885
      %909 = vmatprep.subr.mxu0 0.0
      %910 = vmatpush1.msra.mxu0 %v884
      %911 = vmatprep.subr.mxu0 0.0
      %912 = vmatpush1.msra.mxu0 %v883
      %913 = vmatprep.subr.mxu0 0.0
      %914 = vmatpush1.msra.mxu0 %v882
      %915 = vmatprep.subr.mxu0 0.0
      %916 = vmatpush1.msra.mxu0 %v881
      %917 = vmatprep.subr.mxu0 0.0
      %918 = vmatpush1.msra.mxu0 %v880
      %919 = vmatprep.subr.mxu0 0.0
      %920 = vmatpush1.msra.mxu0 %v879
      %921 = vmatprep.subr.mxu0 0.0
      %922 = vmatpush1.msra.mxu0 %v878
      %923 = vmatprep.subr.mxu0 0.0
      %924 = vmatpush1.msra.mxu0 %v877
      %925 = vmatprep.subr.mxu0 0.0
      %926 = vmatpush2.msra.mxu0 0.0
      %927 = vmatprep.subr.mxu0 0.0
      %928 = vmatpush2.msra.mxu0 0.0
      %929 = vmatprep.subr.mxu0 0.0
      %930 = vmatpush2.msra.mxu0 0.0
      %931 = vmatprep.subr.mxu0 0.0
      %932 = vmatpush2.msra.mxu0 0.0
      %933 = vmatprep.subr.mxu0 0.0
      %934 = vmatpush2.msra.mxu0 0.0
      %935 = vmatprep.subr.mxu0 0.0
      %936 = vmatpush2.msra.mxu0 0.0
      %937 = vmatprep.subr.mxu0 0.0
      %938 = vmatpush2.msra.mxu0 0.0
      %939 = vmatprep.subr.mxu0 0.0
      %940 = vmatpush2.msra.mxu0 0.0
      %941 = vmatprep.subr.mxu0 0.0
      %942 = vmatpush2.msra.mxu0 0.0
      %943 = vmatprep.subr.mxu0 0.0
      %944 = vmatpush2.msra.mxu0 0.0
      %945 = vmatprep.subr.mxu0 0.0
      %946 = vmatpush2.msra.mxu0 0.0
      %947 = vmatprep.subr.mxu0 0.0
      %948 = vmatpush2.msra.mxu0 0.0
      %949 = vmatprep.subr.mxu0 0.0
      %950 = vmatpush2.msra.mxu0 0.0
      %951 = vmatprep.subr.mxu0 0.0
      %952 = vmatpush2.msra.mxu0 0.0
      %953 = vmatprep.subr.mxu0 0.0
      %954 = vmatpush2.msra.mxu0 0.0
      %955 = vmatprep.subr.mxu0 0.0
      %956 = vmatpush2.msra.mxu0 0.0
      %957 = vmatprep.mubr.f32.mxu0 0.0
      %958 = vmatmul.mubr.f32.gmra.mxu0 %v869
      %v959 = vpop.f32.mrf.mxu0
      %v960 = vadd.f32 0.0, %v959
      %v961 = vpop.f32.mrf.mxu0
      %962 = vmatprep.mubr.f32.mxu0 0.0
      %963 = vmatmul.mubr.f32.gmra.mxu0 %v870
      %v964 = vpop.f32.mrf.mxu0
      %v965 = vadd.f32 0.0, %v964
      %v966 = vpop.f32.mrf.mxu0
      %967 = vmatprep.mubr.f32.mxu0 0.0
      %968 = vmatmul.mubr.f32.gmra.mxu0 %v871
      %v969 = vpop.f32.mrf.mxu0
      %v970 = vadd.f32 0.0, %v969
      %v971 = vpop.f32.mrf.mxu0
      %972 = vmatprep.mubr.f32.mxu0 0.0
      %973 = vmatmul.mubr.f32.gmra.mxu0 %v872
      %v974 = vpop.f32.mrf.mxu0
      %v975 = vadd.f32 0.0, %v974
      %v976 = vpop.f32.mrf.mxu0
      %977 = vdwg.mxu0
      %v978 = vadd.f32 %v873, %v960
      %v979 = vadd.f32 %v874, %v965
      %v980 = vadd.f32 %v875, %v970
      %v981 = vadd.f32 %v876, %v975
      %982 = vst [vmem:[%s552] sm:$0xff] %v978
      %983 = vst [vmem:[%s552 + $0x8] sm:$0xff] %v979
      %984 = vst [vmem:[%s552 + $0x10] sm:$0xff] %v980
      %985 = vst [vmem:[%s552 + $0x18] sm:$0xff] %v981
      %s986 = smul.u32 4, %s30
      %p987 = scmp.lt.s32.totalorder %s986, 31
      %s988 = scalar_select %p987, %s986, 31
      %s989 = smul.addr %s988, 8
      %s990 = scalar_lea.vmem %s9, %s989
      // Predicated region
      $region57: #{moe_forward.1} parent=51 // pred_check
        %p991 = pneg %p286
      $region58: #{moe_forward.1} parent=51 // pred_check_branch
        %993 = sbr.rel (%p991) target = $region60
      $region59: #{moe_forward.1} parent=51 // pred_region
        %s994 = smul.u32 4, %s30
      $region60: #{moe_forward.1} parent=51 // pred_fallthru
        _
    $region52: #{moe_forward.1} parent=5 // pred_fallthru
      _
    %p995 = scmp.le.s32.totalorder 2, %s21
    // Predicated region
    $region61: #{moe_forward.1} parent=5 // pred_check
      %p996 = pneg %p995
    $region62: #{moe_forward.1} parent=5 // pred_check_branch
      %998 = sbr.rel (%p996) target = $region64
    $region63: #{moe_forward.1} parent=5 // pred_region
      %s999 = ssub.s32 %s21, 2
      // Predicated region
      $region65: #{moe_forward.1} parent=63 // pred_check
        %p1000 = pneg %p292
      $region66: #{moe_forward.1} parent=63 // pred_check_branch
        %1002 = sbr.rel (%p1000) target = $region68
      $region67: #{moe_forward.1} parent=63 // pred_region
        %s1003 = smul.u32 4, %s32
        %p1004 = scmp.lt.s32.totalorder %s1003, 31
        %s1005 = scalar_select %p1004, %s1003, 31
        %s1006 = smul.addr %s1005, 8
        %s1007 = scalar_lea.vmem %s9, %s1006
      $region68: #{moe_forward.1} parent=63 // pred_fallthru
        _
    $region64: #{moe_forward.1} parent=5 // pred_fallthru
      _
  $region6: #{moe_forward.1} parent=0 // loop_footer
    %s25 = sadd.s32 1, %s21
  $region7: #{moe_forward.1} parent=0 // loop_footer_branch
    %20 = sbr.rel target = $region3
  $region8: #{moe_forward.1} parent=0 // loop_exit
    _

</llo_original>
